<compile_context>
chip_gen: v6e
topology: v6e:2x2x1
jax: 0.10.0
libtpu: 0.0.40
codegen_flags: <defaults>
</compile_context>

<pallas_src>
import functools

import jax
import jax.numpy as jnp
import numpy as np
from jax.experimental import pallas as pl
from jax.experimental.pallas import tpu as pltpu

_LANE = 128


def _embedder_kernel(x_ref, o_ref, *, n_freqs, include_input, c_in, reseed_every):
    """One (batch, row-tile) block.

    x_ref: [1, C_in,  T, 128]   (spatial pixels on sublane x lane)
    o_ref: [1, C_out, T, 128],  C_out = C_in * (include_input + 2 * n_freqs)
    Channel order matches torch.cat(dim=1):
        [x, sin(x*2^0), cos(x*2^0), sin(x*2^1), cos(x*2^1), ...]
    """
    x = x_ref[...].astype(jnp.float32)

    off = 0
    if include_input:
        o_ref[:, 0:c_in, :, :] = x.astype(o_ref.dtype)
        off = c_in

    s = c = None
    for i in range(n_freqs):
        if i % reseed_every == 0:
            # Exact evaluation at f = 2**i (seeds / periodically re-seeds the
            # recurrence; the 2**i multiply is exact in f32).
            xi = x * jnp.float32(2.0 ** i)
            s = jnp.sin(xi)
            c = jnp.cos(xi)
        else:
            # Frequency doubles each step -> double-angle recurrence (~3 VPU ops).
            two_s = s + s
            s, c = two_s * c, 1.0 - two_s * s
        o_ref[:, off:off + c_in, :, :] = s.astype(o_ref.dtype)
        o_ref[:, off + c_in:off + 2 * c_in, :, :] = c.astype(o_ref.dtype)
        off += 2 * c_in


def _choose_row_tiling(S, max_rows):
    """Pick (rows_per_block, padded_rows) for the (rows, 128) spatial layout."""
    rows = -(-S // _LANE)                       # ceil(S / 128)
    if rows <= max_rows:
        return rows, rows                       # full-dim block, no row padding
    start = max_rows - max_rows % 8             # row tile must be a multiple of 8
    for cand in range(start, 7, -8):
        if rows % cand == 0:
            return cand, rows                   # divides exactly, no padding
    blk = max(8, start)                         # rare ragged fallback: pad rows
    return blk, -(-rows // blk) * blk


def embedder_pallas(x, n_freqs, include_input=True, *, max_rows=32,
                    out_dtype=None, reseed_every=8):
    """JAX/Pallas equivalent of Embedder.forward.

    x: [B, C_in, N1, N2] -> [B, C_in * (include_input + 2*n_freqs), N1, N2]
    max_rows:  rows-of-128 per block (sweepable; 32-64 is a good range).
    out_dtype: output dtype (default: same as input; math stays in f32).
    """
    B, C_in, N1, N2 = x.shape
    S = N1 * N2
    n_fns = (1 if include_input else 0) + 2 * n_freqs
    C_out = C_in * n_fns
    out_dtype = x.dtype if out_dtype is None else out_dtype

    sub_rows, rows_pad = _choose_row_tiling(S, max_rows)
    S_pad = rows_pad * _LANE

    xf = x.reshape(B, C_in, S)
    if S_pad != S:
        # Ragged fallback only; the common path (S % 128 == 0 with a dividing
        # row tile) performs no padding and no post-slice.
        xf = jnp.pad(xf, ((0, 0), (0, 0), (0, S_pad - S)))
    x4 = xf.reshape(B, C_in, rows_pad, _LANE)

    grid = (B, rows_pad // sub_rows)
    kernel = functools.partial(_embedder_kernel, n_freqs=n_freqs,
                               include_input=include_input, c_in=C_in,
                               reseed_every=reseed_every)

    out = pl.pallas_call(
        kernel,
        out_shape=jax.ShapeDtypeStruct((B, C_out, rows_pad, _LANE), out_dtype),
        grid=grid,
        in_specs=[pl.BlockSpec((1, C_in, sub_rows, _LANE),
                               lambda b, r: (b, 0, r, 0))],
        out_specs=pl.BlockSpec((1, C_out, sub_rows, _LANE),
                               lambda b, r: (b, 0, r, 0)),
        compiler_params=pltpu.CompilerParams(
            dimension_semantics=("parallel", "parallel")),
    )(x4)

    out = out.reshape(B, C_out, S_pad)
    if S_pad != S:
        out = out[:, :, :S]
    return out.reshape(B, C_out, N1, N2)


def embedder_ref(x, n_freqs, include_input=True):
    """Pure-JAX reference mirroring the PyTorch forward (for correctness check)."""
    outs = []
    if include_input:
        outs.append(x)
    for i in range(n_freqs):
        f = jnp.asarray(2.0 ** i, dtype=x.dtype)
        outs.append(jnp.sin(x * f))
        outs.append(jnp.cos(x * f))
    return jnp.concatenate(outs, axis=1)


if __name__ == "__main__":
    key = jax.random.PRNGKey(0)
    N_freqs = 6                       # freqs 1, 2, 4, ..., 32 (log_sampling=True)
    include_input = True              # C_out = 3 * (1 + 2*6) = 39

    cases = [
        (2, 3, 16, 16),   # module-spec shape: S=256 -> 2 rows of 128, one tile
        (2, 3, 64, 96),   # S=6144 -> 48 rows, sub_rows=24 -> 2 spatial tiles
        (1, 3, 10, 10),   # S=100, not 128-aligned -> exercises ragged fallback
    ]
    for shape in cases:
        key, sub = jax.random.split(key)
        x = jax.random.uniform(sub, shape, minval=-1.0, maxval=1.0,
                               dtype=jnp.float32)
        res = embedder_pallas(x, N_freqs, include_input)
        jax.block_until_ready(res)
        ref = embedder_ref(x, N_freqs, include_input)
        np.testing.assert_allclose(np.asarray(res), np.asarray(ref),
                                   rtol=1e-4, atol=1e-4)

    # bf16-output variant (halves the dominant writeback traffic; math in f32).
    key, sub = jax.random.split(key)
    x = jax.random.uniform(sub, (2, 3, 16, 16), minval=-1.0, maxval=1.0,
                           dtype=jnp.float32)
    res_bf16 = embedder_pallas(x, N_freqs, include_input, out_dtype=jnp.bfloat16)
    jax.block_until_ready(res_bf16)
    np.testing.assert_allclose(np.asarray(res_bf16.astype(jnp.float32)),
                               np.asarray(embedder_ref(x, N_freqs, include_input)),
                               rtol=2e-2, atol=2e-2)

    print("KERNEL_OK")
</pallas_src>

<mosaic_0001>
module attributes {stable_mosaic.version = 11 : i64} {
  func.func @_embedder_kernel(%arg0: i32, %arg1: i32, %arg2: memref<1x3x2x128xf32, #tpu.memory_space<vmem>>, %arg3: memref<1x39x2x128xf32, #tpu.memory_space<vmem>>) attributes {dimension_semantics = [#tpu.dimension_semantics<parallel>, #tpu.dimension_semantics<parallel>], iteration_bounds = array<i64: 2, 1>, scalar_prefetch = 0 : i64, scratch_operands = 0 : i64, tpu.core_type = #tpu.core_type<tc>, window_params = [{transform_indices = @transform_0, window_bounds = array<i64: 1, 3, 2, 128>}, {transform_indices = @transform_1, window_bounds = array<i64: 1, 39, 2, 128>}]} {
    %c0 = arith.constant 0 : index
    %c0_0 = arith.constant 0 : index
    %c0_1 = arith.constant 0 : index
    %c0_2 = arith.constant 0 : index
    %0 = vector.load %arg2[%c0, %c0_0, %c0_1, %c0_2] : memref<1x3x2x128xf32, #tpu.memory_space<vmem>>, vector<1x3x2x128xf32>
    %c0_3 = arith.constant 0 : index
    %c0_4 = arith.constant 0 : index
    %c0_5 = arith.constant 0 : index
    %c0_6 = arith.constant 0 : index
    %1 = vector.load %arg3[%c0_3, %c0_4, %c0_5, %c0_6] : memref<1x39x2x128xf32, #tpu.memory_space<vmem>>, vector<1x3x2x128xf32>
    tpu.vector_store %arg3[%c0_3, %c0_4, %c0_5, %c0_6], %0 {strides = array<i32>} : memref<1x39x2x128xf32, #tpu.memory_space<vmem>>, vector<1x3x2x128xf32>,
    %cst = arith.constant 1.000000e+00 : f32
    %2 = vector.broadcast %cst : f32 to vector<1x3x2x128xf32>
    %3 = arith.mulf %0, %2 : vector<1x3x2x128xf32>
    %4 = math.sin %3 : vector<1x3x2x128xf32>
    %5 = math.cos %3 : vector<1x3x2x128xf32>
    %c0_7 = arith.constant 0 : index
    %c3 = arith.constant 3 : index
    %c0_8 = arith.constant 0 : index
    %c0_9 = arith.constant 0 : index
    %6 = vector.load %arg3[%c0_7, %c3, %c0_8, %c0_9] : memref<1x39x2x128xf32, #tpu.memory_space<vmem>>, vector<1x3x2x128xf32>
    tpu.vector_store %arg3[%c0_7, %c3, %c0_8, %c0_9], %4 {strides = array<i32>} : memref<1x39x2x128xf32, #tpu.memory_space<vmem>>, vector<1x3x2x128xf32>,
    %c0_10 = arith.constant 0 : index
    %c6 = arith.constant 6 : index
    %c0_11 = arith.constant 0 : index
    %c0_12 = arith.constant 0 : index
    %7 = vector.load %arg3[%c0_10, %c6, %c0_11, %c0_12] : memref<1x39x2x128xf32, #tpu.memory_space<vmem>>, vector<1x3x2x128xf32>
    tpu.vector_store %arg3[%c0_10, %c6, %c0_11, %c0_12], %5 {strides = array<i32>} : memref<1x39x2x128xf32, #tpu.memory_space<vmem>>, vector<1x3x2x128xf32>,
    %8 = arith.addf %4, %4 : vector<1x3x2x128xf32>
    %9 = arith.mulf %8, %5 : vector<1x3x2x128xf32>
    %10 = arith.mulf %8, %4 : vector<1x3x2x128xf32>
    %cst_13 = arith.constant 1.000000e+00 : f32
    %11 = vector.broadcast %cst_13 : f32 to vector<1x3x2x128xf32>
    %12 = arith.subf %11, %10 : vector<1x3x2x128xf32>
    %c0_14 = arith.constant 0 : index
    %c9 = arith.constant 9 : index
    %c0_15 = arith.constant 0 : index
    %c0_16 = arith.constant 0 : index
    %13 = vector.load %arg3[%c0_14, %c9, %c0_15, %c0_16] : memref<1x39x2x128xf32, #tpu.memory_space<vmem>>, vector<1x3x2x128xf32>
    tpu.vector_store %arg3[%c0_14, %c9, %c0_15, %c0_16], %9 {strides = array<i32>} : memref<1x39x2x128xf32, #tpu.memory_space<vmem>>, vector<1x3x2x128xf32>,
    %c0_17 = arith.constant 0 : index
    %c12 = arith.constant 12 : index
    %c0_18 = arith.constant 0 : index
    %c0_19 = arith.constant 0 : index
    %14 = vector.load %arg3[%c0_17, %c12, %c0_18, %c0_19] : memref<1x39x2x128xf32, #tpu.memory_space<vmem>>, vector<1x3x2x128xf32>
    tpu.vector_store %arg3[%c0_17, %c12, %c0_18, %c0_19], %12 {strides = array<i32>} : memref<1x39x2x128xf32, #tpu.memory_space<vmem>>, vector<1x3x2x128xf32>,
    %15 = arith.addf %9, %9 : vector<1x3x2x128xf32>
    %16 = arith.mulf %15, %12 : vector<1x3x2x128xf32>
    %17 = arith.mulf %15, %9 : vector<1x3x2x128xf32>
    %cst_20 = arith.constant 1.000000e+00 : f32
    %18 = vector.broadcast %cst_20 : f32 to vector<1x3x2x128xf32>
    %19 = arith.subf %18, %17 : vector<1x3x2x128xf32>
    %c0_21 = arith.constant 0 : index
    %c15 = arith.constant 15 : index
    %c0_22 = arith.constant 0 : index
    %c0_23 = arith.constant 0 : index
    %20 = vector.load %arg3[%c0_21, %c15, %c0_22, %c0_23] : memref<1x39x2x128xf32, #tpu.memory_space<vmem>>, vector<1x3x2x128xf32>
    tpu.vector_store %arg3[%c0_21, %c15, %c0_22, %c0_23], %16 {strides = array<i32>} : memref<1x39x2x128xf32, #tpu.memory_space<vmem>>, vector<1x3x2x128xf32>,
    %c0_24 = arith.constant 0 : index
    %c18 = arith.constant 18 : index
    %c0_25 = arith.constant 0 : index
    %c0_26 = arith.constant 0 : index
    %21 = vector.load %arg3[%c0_24, %c18, %c0_25, %c0_26] : memref<1x39x2x128xf32, #tpu.memory_space<vmem>>, vector<1x3x2x128xf32>
    tpu.vector_store %arg3[%c0_24, %c18, %c0_25, %c0_26], %19 {strides = array<i32>} : memref<1x39x2x128xf32, #tpu.memory_space<vmem>>, vector<1x3x2x128xf32>,
    %22 = arith.addf %16, %16 : vector<1x3x2x128xf32>
    %23 = arith.mulf %22, %19 : vector<1x3x2x128xf32>
    %24 = arith.mulf %22, %16 : vector<1x3x2x128xf32>
    %cst_27 = arith.constant 1.000000e+00 : f32
    %25 = vector.broadcast %cst_27 : f32 to vector<1x3x2x128xf32>
    %26 = arith.subf %25, %24 : vector<1x3x2x128xf32>
    %c0_28 = arith.constant 0 : index
    %c21 = arith.constant 21 : index
    %c0_29 = arith.constant 0 : index
    %c0_30 = arith.constant 0 : index
    %27 = vector.load %arg3[%c0_28, %c21, %c0_29, %c0_30] : memref<1x39x2x128xf32, #tpu.memory_space<vmem>>, vector<1x3x2x128xf32>
    tpu.vector_store %arg3[%c0_28, %c21, %c0_29, %c0_30], %23 {strides = array<i32>} : memref<1x39x2x128xf32, #tpu.memory_space<vmem>>, vector<1x3x2x128xf32>,
    %c0_31 = arith.constant 0 : index
    %c24 = arith.constant 24 : index
    %c0_32 = arith.constant 0 : index
    %c0_33 = arith.constant 0 : index
    %28 = vector.load %arg3[%c0_31, %c24, %c0_32, %c0_33] : memref<1x39x2x128xf32, #tpu.memory_space<vmem>>, vector<1x3x2x128xf32>
    tpu.vector_store %arg3[%c0_31, %c24, %c0_32, %c0_33], %26 {strides = array<i32>} : memref<1x39x2x128xf32, #tpu.memory_space<vmem>>, vector<1x3x2x128xf32>,
    %29 = arith.addf %23, %23 : vector<1x3x2x128xf32>
    %30 = arith.mulf %29, %26 : vector<1x3x2x128xf32>
    %31 = arith.mulf %29, %23 : vector<1x3x2x128xf32>
    %cst_34 = arith.constant 1.000000e+00 : f32
    %32 = vector.broadcast %cst_34 : f32 to vector<1x3x2x128xf32>
    %33 = arith.subf %32, %31 : vector<1x3x2x128xf32>
    %c0_35 = arith.constant 0 : index
    %c27 = arith.constant 27 : index
    %c0_36 = arith.constant 0 : index
    %c0_37 = arith.constant 0 : index
    %34 = vector.load %arg3[%c0_35, %c27, %c0_36, %c0_37] : memref<1x39x2x128xf32, #tpu.memory_space<vmem>>, vector<1x3x2x128xf32>
    tpu.vector_store %arg3[%c0_35, %c27, %c0_36, %c0_37], %30 {strides = array<i32>} : memref<1x39x2x128xf32, #tpu.memory_space<vmem>>, vector<1x3x2x128xf32>,
    %c0_38 = arith.constant 0 : index
    %c30 = arith.constant 30 : index
    %c0_39 = arith.constant 0 : index
    %c0_40 = arith.constant 0 : index
    %35 = vector.load %arg3[%c0_38, %c30, %c0_39, %c0_40] : memref<1x39x2x128xf32, #tpu.memory_space<vmem>>, vector<1x3x2x128xf32>
    tpu.vector_store %arg3[%c0_38, %c30, %c0_39, %c0_40], %33 {strides = array<i32>} : memref<1x39x2x128xf32, #tpu.memory_space<vmem>>, vector<1x3x2x128xf32>,
    %36 = arith.addf %30, %30 : vector<1x3x2x128xf32>
    %37 = arith.mulf %36, %33 : vector<1x3x2x128xf32>
    %38 = arith.mulf %36, %30 : vector<1x3x2x128xf32>
    %cst_41 = arith.constant 1.000000e+00 : f32
    %39 = vector.broadcast %cst_41 : f32 to vector<1x3x2x128xf32>
    %40 = arith.subf %39, %38 : vector<1x3x2x128xf32>
    %c0_42 = arith.constant 0 : index
    %c33 = arith.constant 33 : index
    %c0_43 = arith.constant 0 : index
    %c0_44 = arith.constant 0 : index
    %41 = vector.load %arg3[%c0_42, %c33, %c0_43, %c0_44] : memref<1x39x2x128xf32, #tpu.memory_space<vmem>>, vector<1x3x2x128xf32>
    tpu.vector_store %arg3[%c0_42, %c33, %c0_43, %c0_44], %37 {strides = array<i32>} : memref<1x39x2x128xf32, #tpu.memory_space<vmem>>, vector<1x3x2x128xf32>,
    %c0_45 = arith.constant 0 : index
    %c36 = arith.constant 36 : index
    %c0_46 = arith.constant 0 : index
    %c0_47 = arith.constant 0 : index
    %42 = vector.load %arg3[%c0_45, %c36, %c0_46, %c0_47] : memref<1x39x2x128xf32, #tpu.memory_space<vmem>>, vector<1x3x2x128xf32>
    tpu.vector_store %arg3[%c0_45, %c36, %c0_46, %c0_47], %40 {strides = array<i32>} : memref<1x39x2x128xf32, #tpu.memory_space<vmem>>, vector<1x3x2x128xf32>,
    return
  }
  func.func @transform_0(%arg0: i32, %arg1: i32) -> (i32, i32, i32, i32) {
    %c0_i32 = arith.constant 0 : i32
    %c0_i32_0 = arith.constant 0 : i32
    %c0_i32_1 = arith.constant 0 : i32
    return %arg0, %c0_i32, %arg1, %c0_i32_0 : i32, i32, i32, i32
  }
  func.func @transform_1(%arg0: i32, %arg1: i32) -> (i32, i32, i32, i32) {
    %c0_i32 = arith.constant 0 : i32
    %c0_i32_0 = arith.constant 0 : i32
    %c0_i32_1 = arith.constant 0 : i32
    return %arg0, %c0_i32, %arg1, %c0_i32_0 : i32, i32, i32, i32
  }
}

</mosaic_0001>

<llo_original>
// kernel: tpu_custom_call.1
$region0: #{tpu_custom_call.1}
  #allocation0 [shape = 'u32[]', space=smem, size = 0x4, offset = 0x4, fixed_abs, tag = 'smem constant byte address 0x4 - core index']
  #allocation1 [shape = 'u32[144,128]{1,0:T(1,128)}', space=vmem, size = 0x12000, scoped, tag = 'internal scratch']
  %s0 = inlined_call_operand.hbm [shape: f32[2,3,2,128], index: 0, kind: input, shape index: {}]
  %s1 = inlined_call_operand.hbm [shape: f32[2,39,2,128], index: 1, kind: output, shape index: {}]
  %s2 = sld [smem:[#allocation0]]
  $region41: #{tpu_custom_call.1} parent=0
    _
  %s4 = ssub.s32 1, %s2
  %s5 = scalar_select 0, %s4, %s2
  $region1: #{tpu_custom_call.1} parent=0
    #allocation2 [shape = 'u8[6144]{0}', space=vmem, size = 0x1800, scoped, tag = 'input window, operand 0']
    #allocation3 [shape = 's32[2]{0}', space=sflag, size = 0x8, scoped, tag = 'scoped memory for tpu_custom_call.1']
    #allocation4 [shape = 's32[2]{0}', space=sflag, size = 0x8, scoped, tag = 'scoped memory for tpu_custom_call.1']
    #allocation5 [shape = 'u8[79872]{0}', space=vmem, size = 0x13800, scoped, tag = 'output window, operand 0']
    %6 = vsyncpa [#allocation3], 0
    %s7 = scalar_lea.sflag [#allocation3], 1
    %8 = vsyncpa %s7, 0
    %9 = vsyncpa [#allocation4], 0
    %s10 = scalar_lea.sflag [#allocation4], 1
    %11 = vsyncpa %s10, 0
    loop: start=0, step=1, limit=4
    $region2: #{tpu_custom_call.1} parent=1 // loop_pre_header
      _
    $region3: #{tpu_custom_call.1} parent=1 // loop_header
      %s13 = sphi 0, %s17
      %p14 = scmp.ge.s32.totalorder %s13, 4
      %s20 = sphi 0, %s32
      %s21 = sphi 0, %s28
      %s22 = sphi 0, %s20
      %s23 = sphi 0, %s21
      %s24 = sphi 0, %s22
      %s25 = sphi 0, %s23
      %s37 = sphi 0, %s39
      %s40 = sphi 0, %s37
      %s41 = sphi 0, %s40
      %s57 = sphi 0, %s41
      %s65 = sphi 0, %s67
      %s68 = sphi 0, %s65
      %s69 = sphi 0, %s68
      %s85 = sphi 0, %s69
    $region4: #{tpu_custom_call.1} parent=1 // loop_header_branch
      %16 = sbr.rel (%p14) target = $region8
    $region5: #{tpu_custom_call.1} parent=1 // loop_body
      %s18 = ssub.s32 %s13, 1
      %s19 = ssub.s32 %s13, 2
      %s26 = sadd.s32 1, %s21
      %p27 = scmp.ge.s32.totalorder %s26, 1
      %s28 = scalar_select %p27, 0, %s26
      %s29 = sadd.s32 1, %s20
      %s30 = scalar_select %p27, %s29, %s20
      %p31 = scmp.ge.s32.totalorder %s30, 2
      %s32 = scalar_select %p31, 0, %s30
      %s33 = ssub.s32 %s20, %s32
      %s34 = ssub.s32 %s21, %s28
      %s35 = sor.u32 %s33, %s34
      %p36 = scmp.eq.s32.totalorder %s35, 0
      %s38 = sadd.s32 %s37, 1
      %s39 = scalar_select %p36, %s37, %s38
      %p42 = pneg %p36
      %p43 = scmp.eq.s32.totalorder %s13, 1
      %p44 = por %p42, %p43
      %p45 = scmp.ne.s32.totalorder %s37, %s40
      %p46 = scmp.eq.s32.totalorder %s13, 0
      %p47 = por %p45, %p46
      %p48 = scmp.ne.s32.totalorder %s37, %s40
      %p49 = scmp.eq.s32.totalorder %s18, 1
      %p50 = por %p48, %p49
      %p51 = scmp.ne.s32.totalorder %s40, %s41
      %p52 = scmp.eq.s32.totalorder %s18, 0
      %p53 = por %p51, %p52
      %p54 = scmp.ne.s32.totalorder %s40, %s41
      %p55 = scmp.eq.s32.totalorder %s19, 1
      %p56 = por %p54, %p55
      %p58 = scmp.ne.s32.totalorder %s41, %s57
      %p59 = scmp.eq.s32.totalorder %s19, 0
      %p60 = por %p58, %p59
      %s61 = ssub.s32 %s20, %s32
      %s62 = ssub.s32 %s21, %s28
      %s63 = sor.u32 %s61, %s62
      %p64 = scmp.eq.s32.totalorder %s63, 0
      %s66 = sadd.s32 %s65, 1
      %s67 = scalar_select %p64, %s65, %s66
      %p70 = pneg %p64
      %p71 = scmp.eq.s32.totalorder %s13, 1
      %p72 = por %p70, %p71
      %p73 = scmp.ne.s32.totalorder %s65, %s68
      %p74 = scmp.eq.s32.totalorder %s13, 0
      %p75 = por %p73, %p74
      %p76 = scmp.ne.s32.totalorder %s65, %s68
      %p77 = scmp.eq.s32.totalorder %s18, 1
      %p78 = por %p76, %p77
      %p79 = scmp.ne.s32.totalorder %s68, %s69
      %p80 = scmp.eq.s32.totalorder %s18, 0
      %p81 = por %p79, %p80
      %p82 = scmp.ne.s32.totalorder %s68, %s69
      %p83 = scmp.eq.s32.totalorder %s19, 1
      %p84 = por %p82, %p83
      %p86 = scmp.ne.s32.totalorder %s69, %s85
      %p87 = scmp.eq.s32.totalorder %s19, 0
      %p88 = por %p86, %p87
      %p89 = scmp.le.s32.totalorder 1, %s13
      %p90 = scmp.lt.s32.totalorder %s13, 3
      %p91 = pnand %p89, %p90
      %p92 = pneg %p91
      // Predicated region
      $region9: #{tpu_custom_call.1} parent=5 // pred_check
        _
      $region10: #{tpu_custom_call.1} parent=5 // pred_check_branch
        %94 = sbr.rel (%p91) target = $region12
      $region11: #{tpu_custom_call.1} parent=5 // pred_region
        %s95 = ssub.s32 %s13, 1
      $region12: #{tpu_custom_call.1} parent=5 // pred_fallthru
        _
      %p96 = scmp.lt.s32.totalorder %s13, 2
      // Predicated region
      $region13: #{tpu_custom_call.1} parent=5 // pred_check
        %p97 = pneg %p96
      $region14: #{tpu_custom_call.1} parent=5 // pred_check_branch
        %99 = sbr.rel (%p97) target = $region16
      $region15: #{tpu_custom_call.1} parent=5 // pred_region
        // Predicated region
        $region17: #{tpu_custom_call.1} parent=15 // pred_check
          %p100 = pneg %p47
        $region18: #{tpu_custom_call.1} parent=15 // pred_check_branch
          %102 = sbr.rel (%p100) target = $region20
        $region19: #{tpu_custom_call.1} parent=15 // pred_region
          %s103 = sand.u32 %s37, 1
          %s104 = scalar_lea.sflag [#allocation3], %s103
          %s105 = sand.u32 %s37, 1
          %s106 = smul.addr %s105, 6
          %s107 = scalar_lea.vmem [#allocation2], %s106
          %s109 = ssub.s32 96, 96
          %110 = vsyncadd %s104, %s109
          %s111 = smul.addr %s20, 3
          %s112 = sadd.s32 %s21, %s111
          %s113 = smul.addr %s112, 32
          %s114 = scalar_lea.hbm %s0, %s113
          %s115 = sshll.u32 %s107, 4
          %s116 = int_to_ptr.vmem [resolvable:$true] %s115
          %121 = dma.hbm_to_vmem [thread:$0]  %s114, 96, %s116, %s104, 32, 32, 2
        $region20: #{tpu_custom_call.1} parent=15 // pred_fallthru
          _
      $region16: #{tpu_custom_call.1} parent=5 // pred_fallthru
        _
      %p122 = scmp.le.s32.totalorder 1, %s13
      %p123 = scmp.lt.s32.totalorder %s13, 3
      %p124 = pnand %p122, %p123
      %p125 = pneg %p124
      // Predicated region
      $region21: #{tpu_custom_call.1} parent=5 // pred_check
        _
      $region22: #{tpu_custom_call.1} parent=5 // pred_check_branch
        %127 = sbr.rel (%p124) target = $region24
      $region23: #{tpu_custom_call.1} parent=5 // pred_region
        %s128 = ssub.s32 %s13, 1
        %s129 = sand.u32 %s40, 1
        %s130 = scalar_lea.sflag [#allocation3], %s129
        %s131 = sand.u32 %s40, 1
        %s132 = smul.addr %s131, 6
        %s133 = scalar_lea.vmem [#allocation2], %s132
        // Predicated region
        $region25: #{tpu_custom_call.1} parent=23 // pred_check
          %p134 = pneg %p53
        $region26: #{tpu_custom_call.1} parent=23 // pred_check_branch
          %136 = sbr.rel (%p134) target = $region28
        $region27: #{tpu_custom_call.1} parent=23 // pred_region
          %137 = dma.done %s130, 96
        $region28: #{tpu_custom_call.1} parent=23 // pred_fallthru
          _
        %s138 = sand.u32 %s40, 1
        %s139 = scalar_lea.sflag [#allocation3], %s138
        %s140 = sand.u32 %s40, 1
        %s141 = smul.addr %s140, 6
        %s142 = scalar_lea.vmem [#allocation2], %s141
        %p143 = pneg %p53
        %p144 = pneg %p50
        %p145 = pneg %p81
        %p146 = pneg %p78
        %s147 = sand.u32 %s68, 1
        %s148 = scalar_lea.sflag [#allocation4], %s147
        %s149 = sand.u32 %s68, 1
        %s150 = smul.addr %s149, 78
        %s151 = scalar_lea.vmem [#allocation5], %s150
        %v152 = vld [vmem:[%s133] sm:$0x3]
        %v153 = vld [vmem:[%s133 + $0x2] sm:$0x3]
        %v154 = vld [vmem:[%s133 + $0x4] sm:$0x3]
        %155 = vst [vmem:[%s151] sm:$0x3] %v152
        %156 = vst [vmem:[%s151 + $0x2] sm:$0x3] %v153
        %157 = vst [vmem:[%s151 + $0x4] sm:$0x3] %v154
        %v158 = vand.u32 2147483647, %v152
        %vm159 = vcmp.le.f32.partialorder %v158, 0.7853982
        %vm160 = vcmp.lt.s32.totalorder %v152, 0
        %v161 = vand.u32 %v152, 2139095040
        %v162 = vshrl.u32 %v161, 23
        %v163 = vsub.s32 %v162, 127
        %v164 = vand.u32 2147483647, %v152
        %v165 = vand.u32 %v164, 8388607
        %v166 = vor.u32 %v165, 8388608
        %v167 = vsub.s32 0, %v166
        %v168 = vadd.s32 %v163, 1
        %vm169 = vcmp.gt.s32.totalorder %v168, 0
        %v170 = vsel %vm169, %v168, 0
        %v171 = vshrl.u32 %v170, 5
        %v172 = vand.u32 %v170, 31
        %v173 = vsub.s32 32, %v172
        %v174 = vshrl.u32 683565275, %v173
        %v175 = vshll.u32 683565275, %v172
        %v176 = vshrl.u32 2475754826, %v173
        %v177 = vor.u32 %v175, %v176
        %v178 = vshll.u32 2475754826, %v172
        %v179 = vshrl.u32 2131351028, %v173
        %v180 = vor.u32 %v178, %v179
        %v181 = vshll.u32 2131351028, %v172
        %v182 = vshrl.u32 2102212464, %v173
        %v183 = vor.u32 %v181, %v182
        %v184 = vshll.u32 2102212464, %v172
        %v185 = vshrl.u32 920167782, %v173
        %v186 = vor.u32 %v184, %v185
        %v187 = vshll.u32 920167782, %v172
        %v188 = vshrl.u32 1326507024, %v173
        %v189 = vor.u32 %v187, %v188
        %vm190 = vcmp.lt.s32.totalorder %v171, 1
        %vm191 = vcmp.lt.s32.totalorder %v171, 2
        %vm192 = vcmp.lt.s32.totalorder %v171, 3
        %vm193 = vcmp.lt.s32.totalorder %v171, 4
        %v194 = vsel %vm190, %v174, %v177
        %v195 = vsel %vm193, %v183, 2102212464
        %v196 = vsel %vm192, %v180, %v195
        %v197 = vsel %vm191, %v194, %v196
        %v198 = vsel %vm190, %v177, %v180
        %v199 = vsel %vm193, %v186, 920167782
        %v200 = vsel %vm192, %v183, %v199
        %v201 = vsel %vm191, %v198, %v200
        %v202 = vsel %vm190, %v180, %v183
        %v203 = vsel %vm193, %v189, 1326507024
        %v204 = vsel %vm192, %v186, %v203
        %v205 = vsel %vm191, %v202, %v204
        %v206 = vshll.u32 %v166, 8
        %v207 = vmul.u32.u64.compose %v206, %v205
        %v208 = vextract.low.u32 %v207
        %v209 = vextract.high.u32 %v207
        %v210 = vmul.u32.u64.compose %v206, %v201
        %v211 = vextract.low.u32 %v210
        %v212 = vextract.high.u32 %v210
        %v213 = vmul.u32 %v206, %v197
        %v214 = vadd.s32 %v209, %v211
        %vm215 = vc.u32 %v209, %v211
        %v216 = vadd.s32 %v212, 1
        %v217 = vsel %vm215, %v216, %v212
        %v218 = vadd.s32 %v213, %v217
        %v219 = vadd.s32 %v218, 536870912
        %v220 = vshrl.u32 %v219, 30
        %v221 = vshll.u32 %v220, 30
        %v222 = vsub.s32 %v218, %v221
        %vm223 = vcmp.lt.s32.totalorder %v222, 0
        %v224 = vsub.s32 0, %v222
        %v225 = vsel %vm223, %v224, %v222
        %v226 = vclz %v225
        %v227 = vsub.s32 %v226, 2
        %vm228 = vcmp.gt.s32.totalorder 0, %v227
        %v229 = vsel %vm228, 0, %v227
        %v230 = vsub.s32 32, %v229
        %v231 = vshll.u32 %v222, %v229
        %v232 = vshrl.u32 %v214, %v230
        %v233 = vor.u32 %v231, %v232
        %v234 = vsub.s32 4294967266, %v229
        %v235 = vadd.s32 %v234, 127
        %v236 = vshll.u32 %v235, 23
        %v237 = vor.u32 4788187, %v236
        %v238 = vand.u32 2147483647, %v237
        %v240 = vcvt.s32.f32 %v233
        %v241 = vmul.f32 %v240, %v238
        %v242 = vxor.u32 %v241, 2147483648
        %v243 = vsel %vm160, %v242, %v241
        %v244 = vsub.s32 4, %v220
        %v245 = vsel %vm160, %v244, %v220
        %v246 = vsel %vm159, %v152, %v243
        %v247 = vsel %vm159, 0, %v245
        %v248 = vcosq.f32.pop %v246
        %v249 = vsinq.f32.pop %v246
        %vm250 = vweird.f32 %v152
        %v251 = vadd.s32 %v247, 3
        %v252 = vand.u32 %v251, 3
        %vm253 = vcmp.lt.s32.totalorder %v252, 2
        %vm254 = vcmp.eq.s32.totalorder %v252, 0
        %v255 = vxor.u32 %v249, 2147483648
        %v256 = vsel %vm254, %v248, %v255
        %vm257 = vcmp.eq.s32.totalorder %v252, 2
        %v258 = vxor.u32 %v248, 2147483648
        %v259 = vsel %vm257, %v258, %v249
        %v260 = vsel %vm253, %v256, %v259
        %v261 = vsel %vm250, nan, %v260
        %v262 = vand.u32 2147483647, %v153
        %vm263 = vcmp.le.f32.partialorder %v262, 0.7853982
        %vm264 = vcmp.lt.s32.totalorder %v153, 0
        %v265 = vand.u32 %v153, 2139095040
        %v266 = vshrl.u32 %v265, 23
        %v267 = vsub.s32 %v266, 127
        %v268 = vand.u32 2147483647, %v153
        %v269 = vand.u32 %v268, 8388607
        %v270 = vor.u32 %v269, 8388608
        %v271 = vsub.s32 0, %v270
        %v272 = vadd.s32 %v267, 1
        %vm273 = vcmp.gt.s32.totalorder %v272, 0
        %v274 = vsel %vm273, %v272, 0
        %v275 = vshrl.u32 %v274, 5
        %v276 = vand.u32 %v274, 31
        %v277 = vsub.s32 32, %v276
        %v278 = vshrl.u32 683565275, %v277
        %v279 = vshll.u32 683565275, %v276
        %v280 = vshrl.u32 2475754826, %v277
        %v281 = vor.u32 %v279, %v280
        %v282 = vshll.u32 2475754826, %v276
        %v283 = vshrl.u32 2131351028, %v277
        %v284 = vor.u32 %v282, %v283
        %v285 = vshll.u32 2131351028, %v276
        %v286 = vshrl.u32 2102212464, %v277
        %v287 = vor.u32 %v285, %v286
        %v288 = vshll.u32 2102212464, %v276
        %v289 = vshrl.u32 920167782, %v277
        %v290 = vor.u32 %v288, %v289
        %v291 = vshll.u32 920167782, %v276
        %v292 = vshrl.u32 1326507024, %v277
        %v293 = vor.u32 %v291, %v292
        %vm294 = vcmp.lt.s32.totalorder %v275, 1
        %vm295 = vcmp.lt.s32.totalorder %v275, 2
        %vm296 = vcmp.lt.s32.totalorder %v275, 3
        %vm297 = vcmp.lt.s32.totalorder %v275, 4
        %v298 = vsel %vm294, %v278, %v281
        %v299 = vsel %vm297, %v287, 2102212464
        %v300 = vsel %vm296, %v284, %v299
        %v301 = vsel %vm295, %v298, %v300
        %v302 = vsel %vm294, %v281, %v284
        %v303 = vsel %vm297, %v290, 920167782
        %v304 = vsel %vm296, %v287, %v303
        %v305 = vsel %vm295, %v302, %v304
        %v306 = vsel %vm294, %v284, %v287
        %v307 = vsel %vm297, %v293, 1326507024
        %v308 = vsel %vm296, %v290, %v307
        %v309 = vsel %vm295, %v306, %v308
        %v310 = vshll.u32 %v270, 8
        %v311 = vmul.u32.u64.compose %v310, %v309
        %v312 = vextract.low.u32 %v311
        %v313 = vextract.high.u32 %v311
        %v314 = vmul.u32.u64.compose %v310, %v305
        %v315 = vextract.low.u32 %v314
        %v316 = vextract.high.u32 %v314
        %v317 = vmul.u32 %v310, %v301
        %v318 = vadd.s32 %v313, %v315
        %vm319 = vc.u32 %v313, %v315
        %v320 = vadd.s32 %v316, 1
        %v321 = vsel %vm319, %v320, %v316
        %v322 = vadd.s32 %v317, %v321
        %v323 = vadd.s32 %v322, 536870912
        %v324 = vshrl.u32 %v323, 30
        %v325 = vshll.u32 %v324, 30
        %v326 = vsub.s32 %v322, %v325
        %vm327 = vcmp.lt.s32.totalorder %v326, 0
        %v328 = vsub.s32 0, %v326
        %v329 = vsel %vm327, %v328, %v326
        %v330 = vclz %v329
        %v331 = vsub.s32 %v330, 2
        %vm332 = vcmp.gt.s32.totalorder 0, %v331
        %v333 = vsel %vm332, 0, %v331
        %v334 = vsub.s32 32, %v333
        %v335 = vshll.u32 %v326, %v333
        %v336 = vshrl.u32 %v318, %v334
        %v337 = vor.u32 %v335, %v336
        %v338 = vsub.s32 4294967266, %v333
        %v339 = vadd.s32 %v338, 127
        %v340 = vshll.u32 %v339, 23
        %v341 = vor.u32 4788187, %v340
        %v342 = vand.u32 2147483647, %v341
        %v344 = vcvt.s32.f32 %v337
        %v345 = vmul.f32 %v344, %v342
        %v346 = vxor.u32 %v345, 2147483648
        %v347 = vsel %vm264, %v346, %v345
        %v348 = vsub.s32 4, %v324
        %v349 = vsel %vm264, %v348, %v324
        %v350 = vsel %vm263, %v153, %v347
        %v351 = vsel %vm263, 0, %v349
        %v352 = vcosq.f32.pop %v350
        %v353 = vsinq.f32.pop %v350
        %vm354 = vweird.f32 %v153
        %v355 = vadd.s32 %v351, 3
        %v356 = vand.u32 %v355, 3
        %vm357 = vcmp.lt.s32.totalorder %v356, 2
        %vm358 = vcmp.eq.s32.totalorder %v356, 0
        %v359 = vxor.u32 %v353, 2147483648
        %v360 = vsel %vm358, %v352, %v359
        %vm361 = vcmp.eq.s32.totalorder %v356, 2
        %v362 = vxor.u32 %v352, 2147483648
        %v363 = vsel %vm361, %v362, %v353
        %v364 = vsel %vm357, %v360, %v363
        %v365 = vsel %vm354, nan, %v364
        %v366 = vand.u32 2147483647, %v154
        %vm367 = vcmp.le.f32.partialorder %v366, 0.7853982
        %vm368 = vcmp.lt.s32.totalorder %v154, 0
        %v369 = vand.u32 %v154, 2139095040
        %v370 = vshrl.u32 %v369, 23
        %v371 = vsub.s32 %v370, 127
        %v372 = vand.u32 2147483647, %v154
        %v373 = vand.u32 %v372, 8388607
        %v374 = vor.u32 %v373, 8388608
        %v375 = vsub.s32 0, %v374
        %v376 = vadd.s32 %v371, 1
        %vm377 = vcmp.gt.s32.totalorder %v376, 0
        %v378 = vsel %vm377, %v376, 0
        %v379 = vshrl.u32 %v378, 5
        %v380 = vand.u32 %v378, 31
        %v381 = vsub.s32 32, %v380
        %v382 = vshrl.u32 683565275, %v381
        %v383 = vshll.u32 683565275, %v380
        %v384 = vshrl.u32 2475754826, %v381
        %v385 = vor.u32 %v383, %v384
        %v386 = vshll.u32 2475754826, %v380
        %v387 = vshrl.u32 2131351028, %v381
        %v388 = vor.u32 %v386, %v387
        %v389 = vshll.u32 2131351028, %v380
        %v390 = vshrl.u32 2102212464, %v381
        %v391 = vor.u32 %v389, %v390
        %v392 = vshll.u32 2102212464, %v380
        %v393 = vshrl.u32 920167782, %v381
        %v394 = vor.u32 %v392, %v393
        %v395 = vshll.u32 920167782, %v380
        %v396 = vshrl.u32 1326507024, %v381
        %v397 = vor.u32 %v395, %v396
        %vm398 = vcmp.lt.s32.totalorder %v379, 1
        %vm399 = vcmp.lt.s32.totalorder %v379, 2
        %vm400 = vcmp.lt.s32.totalorder %v379, 3
        %vm401 = vcmp.lt.s32.totalorder %v379, 4
        %v402 = vsel %vm398, %v382, %v385
        %v403 = vsel %vm401, %v391, 2102212464
        %v404 = vsel %vm400, %v388, %v403
        %v405 = vsel %vm399, %v402, %v404
        %v406 = vsel %vm398, %v385, %v388
        %v407 = vsel %vm401, %v394, 920167782
        %v408 = vsel %vm400, %v391, %v407
        %v409 = vsel %vm399, %v406, %v408
        %v410 = vsel %vm398, %v388, %v391
        %v411 = vsel %vm401, %v397, 1326507024
        %v412 = vsel %vm400, %v394, %v411
        %v413 = vsel %vm399, %v410, %v412
        %v414 = vshll.u32 %v374, 8
        %v415 = vmul.u32.u64.compose %v414, %v413
        %v416 = vextract.low.u32 %v415
        %v417 = vextract.high.u32 %v415
        %v418 = vmul.u32.u64.compose %v414, %v409
        %v419 = vextract.low.u32 %v418
        %v420 = vextract.high.u32 %v418
        %v421 = vmul.u32 %v414, %v405
        %v422 = vadd.s32 %v417, %v419
        %vm423 = vc.u32 %v417, %v419
        %v424 = vadd.s32 %v420, 1
        %v425 = vsel %vm423, %v424, %v420
        %v426 = vadd.s32 %v421, %v425
        %v427 = vadd.s32 %v426, 536870912
        %v428 = vshrl.u32 %v427, 30
        %v429 = vshll.u32 %v428, 30
        %v430 = vsub.s32 %v426, %v429
        %vm431 = vcmp.lt.s32.totalorder %v430, 0
        %v432 = vsub.s32 0, %v430
        %v433 = vsel %vm431, %v432, %v430
        %v434 = vclz %v433
        %v435 = vsub.s32 %v434, 2
        %vm436 = vcmp.gt.s32.totalorder 0, %v435
        %v437 = vsel %vm436, 0, %v435
        %v438 = vsub.s32 32, %v437
        %v439 = vshll.u32 %v430, %v437
        %v440 = vshrl.u32 %v422, %v438
        %v441 = vor.u32 %v439, %v440
        %v442 = vsub.s32 4294967266, %v437
        %v443 = vadd.s32 %v442, 127
        %v444 = vshll.u32 %v443, 23
        %v445 = vor.u32 4788187, %v444
        %v446 = vand.u32 2147483647, %v445
        %v448 = vcvt.s32.f32 %v441
        %v449 = vmul.f32 %v448, %v446
        %v450 = vxor.u32 %v449, 2147483648
        %v451 = vsel %vm368, %v450, %v449
        %v452 = vsub.s32 4, %v428
        %v453 = vsel %vm368, %v452, %v428
        %v454 = vsel %vm367, %v154, %v451
        %v455 = vsel %vm367, 0, %v453
        %v456 = vcosq.f32.pop %v454
        %v457 = vsinq.f32.pop %v454
        %vm458 = vweird.f32 %v154
        %v459 = vadd.s32 %v455, 3
        %v460 = vand.u32 %v459, 3
        %vm461 = vcmp.lt.s32.totalorder %v460, 2
        %vm462 = vcmp.eq.s32.totalorder %v460, 0
        %v463 = vxor.u32 %v457, 2147483648
        %v464 = vsel %vm462, %v456, %v463
        %vm465 = vcmp.eq.s32.totalorder %v460, 2
        %v466 = vxor.u32 %v456, 2147483648
        %v467 = vsel %vm465, %v466, %v457
        %v468 = vsel %vm461, %v464, %v467
        %v469 = vsel %vm458, nan, %v468
        %v470 = vand.u32 2147483647, %v152
        %vm471 = vcmp.le.f32.partialorder %v470, 0.7853982
        %vm472 = vcmp.lt.s32.totalorder %v152, 0
        %v473 = vand.u32 %v152, 2139095040
        %v474 = vshrl.u32 %v473, 23
        %v475 = vsub.s32 %v474, 127
        %v476 = vand.u32 2147483647, %v152
        %v477 = vand.u32 %v476, 8388607
        %v478 = vor.u32 %v477, 8388608
        %v479 = vsub.s32 0, %v478
        %v480 = vadd.s32 %v475, 1
        %vm481 = vcmp.gt.s32.totalorder %v480, 0
        %v482 = vsel %vm481, %v480, 0
        %v483 = vshrl.u32 %v482, 5
        %v484 = vand.u32 %v482, 31
        %v485 = vsub.s32 32, %v484
        %v486 = vshrl.u32 683565275, %v485
        %v487 = vshll.u32 683565275, %v484
        %v488 = vshrl.u32 2475754826, %v485
        %v489 = vor.u32 %v487, %v488
        %v490 = vshll.u32 2475754826, %v484
        %v491 = vshrl.u32 2131351028, %v485
        %v492 = vor.u32 %v490, %v491
        %v493 = vshll.u32 2131351028, %v484
        %v494 = vshrl.u32 2102212464, %v485
        %v495 = vor.u32 %v493, %v494
        %v496 = vshll.u32 2102212464, %v484
        %v497 = vshrl.u32 920167782, %v485
        %v498 = vor.u32 %v496, %v497
        %v499 = vshll.u32 920167782, %v484
        %v500 = vshrl.u32 1326507024, %v485
        %v501 = vor.u32 %v499, %v500
        %vm502 = vcmp.lt.s32.totalorder %v483, 1
        %vm503 = vcmp.lt.s32.totalorder %v483, 2
        %vm504 = vcmp.lt.s32.totalorder %v483, 3
        %vm505 = vcmp.lt.s32.totalorder %v483, 4
        %v506 = vsel %vm502, %v486, %v489
        %v507 = vsel %vm505, %v495, 2102212464
        %v508 = vsel %vm504, %v492, %v507
        %v509 = vsel %vm503, %v506, %v508
        %v510 = vsel %vm502, %v489, %v492
        %v511 = vsel %vm505, %v498, 920167782
        %v512 = vsel %vm504, %v495, %v511
        %v513 = vsel %vm503, %v510, %v512
        %v514 = vsel %vm502, %v492, %v495
        %v515 = vsel %vm505, %v501, 1326507024
        %v516 = vsel %vm504, %v498, %v515
        %v517 = vsel %vm503, %v514, %v516
        %v518 = vshll.u32 %v478, 8
        %v519 = vmul.u32.u64.compose %v518, %v517
        %v520 = vextract.low.u32 %v519
        %v521 = vextract.high.u32 %v519
        %v522 = vmul.u32.u64.compose %v518, %v513
        %v523 = vextract.low.u32 %v522
        %v524 = vextract.high.u32 %v522
        %v525 = vmul.u32 %v518, %v509
        %v526 = vadd.s32 %v521, %v523
        %vm527 = vc.u32 %v521, %v523
        %v528 = vadd.s32 %v524, 1
        %v529 = vsel %vm527, %v528, %v524
        %v530 = vadd.s32 %v525, %v529
        %v531 = vadd.s32 %v530, 536870912
        %v532 = vshrl.u32 %v531, 30
        %v533 = vshll.u32 %v532, 30
        %v534 = vsub.s32 %v530, %v533
        %vm535 = vcmp.lt.s32.totalorder %v534, 0
        %v536 = vsub.s32 0, %v534
        %v537 = vsel %vm535, %v536, %v534
        %v538 = vclz %v537
        %v539 = vsub.s32 %v538, 2
        %vm540 = vcmp.gt.s32.totalorder 0, %v539
        %v541 = vsel %vm540, 0, %v539
        %v542 = vsub.s32 32, %v541
        %v543 = vshll.u32 %v534, %v541
        %v544 = vshrl.u32 %v526, %v542
        %v545 = vor.u32 %v543, %v544
        %v546 = vsub.s32 4294967266, %v541
        %v547 = vadd.s32 %v546, 127
        %v548 = vshll.u32 %v547, 23
        %v549 = vor.u32 4788187, %v548
        %v550 = vand.u32 2147483647, %v549
        %v552 = vcvt.s32.f32 %v545
        %v553 = vmul.f32 %v552, %v550
        %v554 = vxor.u32 %v553, 2147483648
        %v555 = vsel %vm472, %v554, %v553
        %v556 = vsub.s32 4, %v532
        %v557 = vsel %vm472, %v556, %v532
        %v558 = vsel %vm471, %v152, %v555
        %v559 = vsel %vm471, 0, %v557
        %v560 = vcosq.f32.pop %v558
        %v561 = vsinq.f32.pop %v558
        %vm562 = vweird.f32 %v152
        %v563 = vand.u32 %v559, 3
        %vm564 = vcmp.lt.s32.totalorder %v563, 2
        %vm565 = vcmp.eq.s32.totalorder %v563, 0
        %v566 = vxor.u32 %v561, 2147483648
        %v567 = vsel %vm565, %v560, %v566
        %vm568 = vcmp.eq.s32.totalorder %v563, 2
        %v569 = vxor.u32 %v560, 2147483648
        %v570 = vsel %vm568, %v569, %v561
        %v571 = vsel %vm564, %v567, %v570
        %v572 = vsel %vm562, nan, %v571
        %v573 = vand.u32 2147483647, %v153
        %vm574 = vcmp.le.f32.partialorder %v573, 0.7853982
        %vm575 = vcmp.lt.s32.totalorder %v153, 0
        %v576 = vand.u32 %v153, 2139095040
        %v577 = vshrl.u32 %v576, 23
        %v578 = vsub.s32 %v577, 127
        %v579 = vand.u32 2147483647, %v153
        %v580 = vand.u32 %v579, 8388607
        %v581 = vor.u32 %v580, 8388608
        %v582 = vsub.s32 0, %v581
        %v583 = vadd.s32 %v578, 1
        %vm584 = vcmp.gt.s32.totalorder %v583, 0
        %v585 = vsel %vm584, %v583, 0
        %v586 = vshrl.u32 %v585, 5
        %v587 = vand.u32 %v585, 31
        %v588 = vsub.s32 32, %v587
        %v589 = vshrl.u32 683565275, %v588
        %v590 = vshll.u32 683565275, %v587
        %v591 = vshrl.u32 2475754826, %v588
        %v592 = vor.u32 %v590, %v591
        %v593 = vshll.u32 2475754826, %v587
        %v594 = vshrl.u32 2131351028, %v588
        %v595 = vor.u32 %v593, %v594
        %v596 = vshll.u32 2131351028, %v587
        %v597 = vshrl.u32 2102212464, %v588
        %v598 = vor.u32 %v596, %v597
        %v599 = vshll.u32 2102212464, %v587
        %v600 = vshrl.u32 920167782, %v588
        %v601 = vor.u32 %v599, %v600
        %v602 = vshll.u32 920167782, %v587
        %v603 = vshrl.u32 1326507024, %v588
        %v604 = vor.u32 %v602, %v603
        %vm605 = vcmp.lt.s32.totalorder %v586, 1
        %vm606 = vcmp.lt.s32.totalorder %v586, 2
        %vm607 = vcmp.lt.s32.totalorder %v586, 3
        %vm608 = vcmp.lt.s32.totalorder %v586, 4
        %v609 = vsel %vm605, %v589, %v592
        %v610 = vsel %vm608, %v598, 2102212464
        %v611 = vsel %vm607, %v595, %v610
        %v612 = vsel %vm606, %v609, %v611
        %v613 = vsel %vm605, %v592, %v595
        %v614 = vsel %vm608, %v601, 920167782
        %v615 = vsel %vm607, %v598, %v614
        %v616 = vsel %vm606, %v613, %v615
        %v617 = vsel %vm605, %v595, %v598
        %v618 = vsel %vm608, %v604, 1326507024
        %v619 = vsel %vm607, %v601, %v618
        %v620 = vsel %vm606, %v617, %v619
        %v621 = vshll.u32 %v581, 8
        %v622 = vmul.u32.u64.compose %v621, %v620
        %v623 = vextract.low.u32 %v622
        %v624 = vextract.high.u32 %v622
        %v625 = vmul.u32.u64.compose %v621, %v616
        %v626 = vextract.low.u32 %v625
        %v627 = vextract.high.u32 %v625
        %v628 = vmul.u32 %v621, %v612
        %v629 = vadd.s32 %v624, %v626
        %vm630 = vc.u32 %v624, %v626
        %v631 = vadd.s32 %v627, 1
        %v632 = vsel %vm630, %v631, %v627
        %v633 = vadd.s32 %v628, %v632
        %v634 = vadd.s32 %v633, 536870912
        %v635 = vshrl.u32 %v634, 30
        %v636 = vshll.u32 %v635, 30
        %v637 = vsub.s32 %v633, %v636
        %vm638 = vcmp.lt.s32.totalorder %v637, 0
        %v639 = vsub.s32 0, %v637
        %v640 = vsel %vm638, %v639, %v637
        %v641 = vclz %v640
        %v642 = vsub.s32 %v641, 2
        %vm643 = vcmp.gt.s32.totalorder 0, %v642
        %v644 = vsel %vm643, 0, %v642
        %v645 = vsub.s32 32, %v644
        %v646 = vshll.u32 %v637, %v644
        %v647 = vshrl.u32 %v629, %v645
        %v648 = vor.u32 %v646, %v647
        %v649 = vsub.s32 4294967266, %v644
        %v650 = vadd.s32 %v649, 127
        %v651 = vshll.u32 %v650, 23
        %v652 = vor.u32 4788187, %v651
        %v653 = vand.u32 2147483647, %v652
        %v655 = vcvt.s32.f32 %v648
        %v656 = vmul.f32 %v655, %v653
        %v657 = vxor.u32 %v656, 2147483648
        %v658 = vsel %vm575, %v657, %v656
        %v659 = vsub.s32 4, %v635
        %v660 = vsel %vm575, %v659, %v635
        %v661 = vsel %vm574, %v153, %v658
        %v662 = vsel %vm574, 0, %v660
        %v663 = vcosq.f32.pop %v661
        %v664 = vsinq.f32.pop %v661
        %vm665 = vweird.f32 %v153
        %v666 = vand.u32 %v662, 3
        %vm667 = vcmp.lt.s32.totalorder %v666, 2
        %vm668 = vcmp.eq.s32.totalorder %v666, 0
        %v669 = vxor.u32 %v664, 2147483648
        %v670 = vsel %vm668, %v663, %v669
        %vm671 = vcmp.eq.s32.totalorder %v666, 2
        %v672 = vxor.u32 %v663, 2147483648
        %v673 = vsel %vm671, %v672, %v664
        %v674 = vsel %vm667, %v670, %v673
        %v675 = vsel %vm665, nan, %v674
        %v676 = vand.u32 2147483647, %v154
        %vm677 = vcmp.le.f32.partialorder %v676, 0.7853982
        %vm678 = vcmp.lt.s32.totalorder %v154, 0
        %v679 = vand.u32 %v154, 2139095040
        %v680 = vshrl.u32 %v679, 23
        %v681 = vsub.s32 %v680, 127
        %v682 = vand.u32 2147483647, %v154
        %v683 = vand.u32 %v682, 8388607
        %v684 = vor.u32 %v683, 8388608
        %v685 = vsub.s32 0, %v684
        %v686 = vadd.s32 %v681, 1
        %vm687 = vcmp.gt.s32.totalorder %v686, 0
        %v688 = vsel %vm687, %v686, 0
        %v689 = vshrl.u32 %v688, 5
        %v690 = vand.u32 %v688, 31
        %v691 = vsub.s32 32, %v690
        %v692 = vshrl.u32 683565275, %v691
        %v693 = vshll.u32 683565275, %v690
        %v694 = vshrl.u32 2475754826, %v691
        %v695 = vor.u32 %v693, %v694
        %v696 = vshll.u32 2475754826, %v690
        %v697 = vshrl.u32 2131351028, %v691
        %v698 = vor.u32 %v696, %v697
        %v699 = vshll.u32 2131351028, %v690
        %v700 = vshrl.u32 2102212464, %v691
        %v701 = vor.u32 %v699, %v700
        %v702 = vshll.u32 2102212464, %v690
        %v703 = vshrl.u32 920167782, %v691
        %v704 = vor.u32 %v702, %v703
        %v705 = vshll.u32 920167782, %v690
        %v706 = vshrl.u32 1326507024, %v691
        %v707 = vor.u32 %v705, %v706
        %vm708 = vcmp.lt.s32.totalorder %v689, 1
        %vm709 = vcmp.lt.s32.totalorder %v689, 2
        %vm710 = vcmp.lt.s32.totalorder %v689, 3
        %vm711 = vcmp.lt.s32.totalorder %v689, 4
        %v712 = vsel %vm708, %v692, %v695
        %v713 = vsel %vm711, %v701, 2102212464
        %v714 = vsel %vm710, %v698, %v713
        %v715 = vsel %vm709, %v712, %v714
        %v716 = vsel %vm708, %v695, %v698
        %v717 = vsel %vm711, %v704, 920167782
        %v718 = vsel %vm710, %v701, %v717
        %v719 = vsel %vm709, %v716, %v718
        %v720 = vsel %vm708, %v698, %v701
        %v721 = vsel %vm711, %v707, 1326507024
        %v722 = vsel %vm710, %v704, %v721
        %v723 = vsel %vm709, %v720, %v722
        %v724 = vshll.u32 %v684, 8
        %v725 = vmul.u32.u64.compose %v724, %v723
        %v726 = vextract.low.u32 %v725
        %v727 = vextract.high.u32 %v725
        %v728 = vmul.u32.u64.compose %v724, %v719
        %v729 = vextract.low.u32 %v728
        %v730 = vextract.high.u32 %v728
        %v731 = vmul.u32 %v724, %v715
        %v732 = vadd.s32 %v727, %v729
        %vm733 = vc.u32 %v727, %v729
        %v734 = vadd.s32 %v730, 1
        %v735 = vsel %vm733, %v734, %v730
        %v736 = vadd.s32 %v731, %v735
        %v737 = vadd.s32 %v736, 536870912
        %v738 = vshrl.u32 %v737, 30
        %v739 = vshll.u32 %v738, 30
        %v740 = vsub.s32 %v736, %v739
        %vm741 = vcmp.lt.s32.totalorder %v740, 0
        %v742 = vsub.s32 0, %v740
        %v743 = vsel %vm741, %v742, %v740
        %v744 = vclz %v743
        %v745 = vsub.s32 %v744, 2
        %vm746 = vcmp.gt.s32.totalorder 0, %v745
        %v747 = vsel %vm746, 0, %v745
        %v748 = vsub.s32 32, %v747
        %v749 = vshll.u32 %v740, %v747
        %v750 = vshrl.u32 %v732, %v748
        %v751 = vor.u32 %v749, %v750
        %v752 = vsub.s32 4294967266, %v747
        %v753 = vadd.s32 %v752, 127
        %v754 = vshll.u32 %v753, 23
        %v755 = vor.u32 4788187, %v754
        %v756 = vand.u32 2147483647, %v755
        %v758 = vcvt.s32.f32 %v751
        %v759 = vmul.f32 %v758, %v756
        %v760 = vxor.u32 %v759, 2147483648
        %v761 = vsel %vm678, %v760, %v759
        %v762 = vsub.s32 4, %v738
        %v763 = vsel %vm678, %v762, %v738
        %v764 = vsel %vm677, %v154, %v761
        %v765 = vsel %vm677, 0, %v763
        %v766 = vcosq.f32.pop %v764
        %v767 = vsinq.f32.pop %v764
        %vm768 = vweird.f32 %v154
        %v769 = vand.u32 %v765, 3
        %vm770 = vcmp.lt.s32.totalorder %v769, 2
        %vm771 = vcmp.eq.s32.totalorder %v769, 0
        %v772 = vxor.u32 %v767, 2147483648
        %v773 = vsel %vm771, %v766, %v772
        %vm774 = vcmp.eq.s32.totalorder %v769, 2
        %v775 = vxor.u32 %v766, 2147483648
        %v776 = vsel %vm774, %v775, %v767
        %v777 = vsel %vm770, %v773, %v776
        %v778 = vsel %vm768, nan, %v777
        %s779 = scalar_lea.vmem %s151, 6 [#allocation5]
        %780 = vst [vmem:[%s779] sm:$0x3] %v261
        %781 = vst [vmem:[%s779 + $0x2] sm:$0x3] %v365
        %782 = vst [vmem:[%s779 + $0x4] sm:$0x3] %v469
        %s783 = scalar_lea.vmem %s151, 12 [#allocation5]
        %784 = vst [vmem:[%s783] sm:$0x3] %v572
        %785 = vst [vmem:[%s783 + $0x2] sm:$0x3] %v675
        %786 = vst [vmem:[%s783 + $0x4] sm:$0x3] %v778
        %v787 = vadd.f32 %v261, %v261
        %v788 = vadd.f32 %v365, %v365
        %v789 = vadd.f32 %v469, %v469
        %v790 = vmul.f32 %v787, %v572
        %v791 = vmul.f32 %v788, %v675
        %v792 = vmul.f32 %v789, %v778
        %v793 = vmul.f32 %v787, %v261
        %v794 = vmul.f32 %v788, %v365
        %v795 = vmul.f32 %v789, %v469
        %v796 = vsub.f32 1.0, %v793
        %v797 = vsub.f32 1.0, %v794
        %v798 = vsub.f32 1.0, %v795
        %s799 = scalar_lea.vmem %s151, 18 [#allocation5]
        %800 = vst [vmem:[%s799] sm:$0x3] %v790
        %801 = vst [vmem:[%s799 + $0x2] sm:$0x3] %v791
        %802 = vst [vmem:[%s799 + $0x4] sm:$0x3] %v792
        %s803 = scalar_lea.vmem %s151, 24 [#allocation5]
        %804 = vst [vmem:[%s803] sm:$0x3] %v796
        %805 = vst [vmem:[%s803 + $0x2] sm:$0x3] %v797
        %806 = vst [vmem:[%s803 + $0x4] sm:$0x3] %v798
        %v807 = vadd.f32 %v790, %v790
        %v808 = vadd.f32 %v791, %v791
        %v809 = vadd.f32 %v792, %v792
        %v810 = vmul.f32 %v807, %v796
        %v811 = vmul.f32 %v808, %v797
        %v812 = vmul.f32 %v809, %v798
        %v813 = vmul.f32 %v807, %v790
        %v814 = vmul.f32 %v808, %v791
        %v815 = vmul.f32 %v809, %v792
        %v816 = vsub.f32 1.0, %v813
        %v817 = vsub.f32 1.0, %v814
        %v818 = vsub.f32 1.0, %v815
        %s819 = scalar_lea.vmem %s151, 30 [#allocation5]
        %820 = vst [vmem:[%s819] sm:$0x3] %v810
        %821 = vst [vmem:[%s819 + $0x2] sm:$0x3] %v811
        %822 = vst [vmem:[%s819 + $0x4] sm:$0x3] %v812
        %s823 = scalar_lea.vmem %s151, 36 [#allocation5]
        %824 = vst [vmem:[%s823] sm:$0x3] %v816
        %825 = vst [vmem:[%s823 + $0x2] sm:$0x3] %v817
        %826 = vst [vmem:[%s823 + $0x4] sm:$0x3] %v818
        %v827 = vadd.f32 %v810, %v810
        %v828 = vadd.f32 %v811, %v811
        %v829 = vadd.f32 %v812, %v812
        %v830 = vmul.f32 %v827, %v816
        %v831 = vmul.f32 %v828, %v817
        %v832 = vmul.f32 %v829, %v818
        %v833 = vmul.f32 %v827, %v810
        %v834 = vmul.f32 %v828, %v811
        %v835 = vmul.f32 %v829, %v812
        %v836 = vsub.f32 1.0, %v833
        %v837 = vsub.f32 1.0, %v834
        %v838 = vsub.f32 1.0, %v835
        %s839 = scalar_lea.vmem %s151, 42 [#allocation5]
        %840 = vst [vmem:[%s839] sm:$0x3] %v830
        %841 = vst [vmem:[%s839 + $0x2] sm:$0x3] %v831
        %842 = vst [vmem:[%s839 + $0x4] sm:$0x3] %v832
        %s843 = scalar_lea.vmem %s151, 48 [#allocation5]
        %844 = vst [vmem:[%s843] sm:$0x3] %v836
        %845 = vst [vmem:[%s843 + $0x2] sm:$0x3] %v837
        %846 = vst [vmem:[%s843 + $0x4] sm:$0x3] %v838
        %v847 = vadd.f32 %v830, %v830
        %v848 = vadd.f32 %v831, %v831
        %v849 = vadd.f32 %v832, %v832
        %v850 = vmul.f32 %v847, %v836
        %v851 = vmul.f32 %v848, %v837
        %v852 = vmul.f32 %v849, %v838
        %v853 = vmul.f32 %v847, %v830
        %v854 = vmul.f32 %v848, %v831
        %v855 = vmul.f32 %v849, %v832
        %v856 = vsub.f32 1.0, %v853
        %v857 = vsub.f32 1.0, %v854
        %v858 = vsub.f32 1.0, %v855
        %s859 = scalar_lea.vmem %s151, 54 [#allocation5]
        %860 = vst [vmem:[%s859] sm:$0x3] %v850
        %861 = vst [vmem:[%s859 + $0x2] sm:$0x3] %v851
        %862 = vst [vmem:[%s859 + $0x4] sm:$0x3] %v852
        %s863 = scalar_lea.vmem %s151, 60 [#allocation5]
        %864 = vst [vmem:[%s863] sm:$0x3] %v856
        %865 = vst [vmem:[%s863 + $0x2] sm:$0x3] %v857
        %866 = vst [vmem:[%s863 + $0x4] sm:$0x3] %v858
        %v867 = vadd.f32 %v850, %v850
        %v868 = vadd.f32 %v851, %v851
        %v869 = vadd.f32 %v852, %v852
        %v870 = vmul.f32 %v867, %v856
        %v871 = vmul.f32 %v868, %v857
        %v872 = vmul.f32 %v869, %v858
        %v873 = vmul.f32 %v867, %v850
        %v874 = vmul.f32 %v868, %v851
        %v875 = vmul.f32 %v869, %v852
        %v876 = vsub.f32 1.0, %v873
        %v877 = vsub.f32 1.0, %v874
        %v878 = vsub.f32 1.0, %v875
        %s879 = scalar_lea.vmem %s151, 66 [#allocation5]
        %880 = vst [vmem:[%s879] sm:$0x3] %v870
        %881 = vst [vmem:[%s879 + $0x2] sm:$0x3] %v871
        %882 = vst [vmem:[%s879 + $0x4] sm:$0x3] %v872
        %s883 = scalar_lea.vmem %s151, 72 [#allocation5]
        %884 = vst [vmem:[%s883] sm:$0x3] %v876
        %885 = vst [vmem:[%s883 + $0x2] sm:$0x3] %v877
        %886 = vst [vmem:[%s883 + $0x4] sm:$0x3] %v878
        %s887 = sand.u32 %s68, 1
        %s888 = scalar_lea.sflag [#allocation4], %s887
        %s889 = sand.u32 %s68, 1
        %s890 = smul.addr %s889, 78
        %s891 = scalar_lea.vmem [#allocation5], %s890
        // Predicated region
        $region29: #{tpu_custom_call.1} parent=23 // pred_check
          %p892 = pneg %p78
        $region30: #{tpu_custom_call.1} parent=23 // pred_check_branch
          %894 = sbr.rel (%p892) target = $region32
        $region31: #{tpu_custom_call.1} parent=23 // pred_region
          %s896 = ssub.s32 1248, 1248
          %897 = vsyncadd %s888, %s896
          %s898 = smul.addr %s22, 39
          %s899 = sadd.s32 %s23, %s898
          %s900 = smul.addr %s899, 32
          %s901 = scalar_lea.hbm %s1, %s900
          %s902 = sshll.u32 %s891, 4
          %s903 = int_to_ptr.vmem [resolvable:$true] %s902
          %908 = dma.vmem_to_hbm [thread:$0]  %s903, 1248, %s901, %s888, 32, 32, 2
        $region32: #{tpu_custom_call.1} parent=23 // pred_fallthru
          _
      $region24: #{tpu_custom_call.1} parent=5 // pred_fallthru
        _
      %p909 = scmp.le.s32.totalorder 2, %s13
      // Predicated region
      $region33: #{tpu_custom_call.1} parent=5 // pred_check
        %p910 = pneg %p909
      $region34: #{tpu_custom_call.1} parent=5 // pred_check_branch
        %912 = sbr.rel (%p910) target = $region36
      $region35: #{tpu_custom_call.1} parent=5 // pred_region
        %s913 = ssub.s32 %s13, 2
        // Predicated region
        $region37: #{tpu_custom_call.1} parent=35 // pred_check
          %p914 = pneg %p84
        $region38: #{tpu_custom_call.1} parent=35 // pred_check_branch
          %916 = sbr.rel (%p914) target = $region40
        $region39: #{tpu_custom_call.1} parent=35 // pred_region
          %s917 = sand.u32 %s69, 1
          %s918 = scalar_lea.sflag [#allocation4], %s917
          %s919 = sand.u32 %s69, 1
          %s920 = smul.addr %s919, 78
          %s921 = scalar_lea.vmem [#allocation5], %s920
          %922 = dma.done %s918, 1248
        $region40: #{tpu_custom_call.1} parent=35 // pred_fallthru
          _
      $region36: #{tpu_custom_call.1} parent=5 // pred_fallthru
        _
    $region6: #{tpu_custom_call.1} parent=1 // loop_footer
      %s17 = sadd.s32 1, %s13
    $region7: #{tpu_custom_call.1} parent=1 // loop_footer_branch
      %12 = sbr.rel target = $region3
    $region8: #{tpu_custom_call.1} parent=1 // loop_exit
      _
    %923 = vsyncpa [#allocation3], 1
    %s924 = scalar_lea.sflag [#allocation3], 1
    %925 = vsyncpa %s924, 1
    %926 = vsyncpa [#allocation4], 1
    %s927 = scalar_lea.sflag [#allocation4], 1
    %928 = vsyncpa %s927, 1

</llo_original>
